<compile_context>
chip_gen: v7x
topology: tpu7x:2x2x1
jax: 0.10.0
libtpu: 0.0.40
codegen_flags: <defaults>
</compile_context>

<pallas_src>
import math

import jax
import jax.numpy as jnp
from jax.experimental import pallas as pl
from jax.experimental.pallas import tpu as pltpu

N_FFT = 256
HOP = 100                    # length // 2
WIN_LEN = 200                # length
N_BINS = N_FFT // 2 + 1      # 129 onesided bins
N_PAD = N_FFT                # bins lane-padded to 256 (cols 129..255 are zero)
OUT_DIM = 128
TILE_R = 512                 # frames per grid step (mult. of 8, v7x-VMEM safe)
DB_SCALE = 10.0 / math.log(10.0)   # 20*log10(sqrt(p)) == 10*log10(p)
POWER_EPS = 1e-30            # clamp: avoids log(0) on silent / zero-padded rows


def _freq_embed_kernel(frames_ref, basis_ref, w_ref, b_ref, out_ref):
    # frames_ref: (tr, N_FFT)        raw (unwindowed) time frames
    # basis_ref : (N_FFT, 2*N_PAD)   window-folded [cos | -sin] DFT basis
    # w_ref     : (N_PAD, OUT_DIM)   projection weight, zero rows for pad bins
    # b_ref     : (1, OUT_DIM)
    f = frames_ref[...]
    # Single fused MXU pass for real+imag spectra: (tr, 512).
    spec = jnp.dot(f, basis_ref[...], preferred_element_type=jnp.float32)
    re = spec[:, :N_PAD]
    im = spec[:, N_PAD:]
    power = re * re + im * im
    # 20*log10(|X|) == 10*log10(|X|^2); eps clamp handles exact zeros.
    db = DB_SCALE * jnp.log(jnp.maximum(power, POWER_EPS))
    out_ref[...] = (
        jnp.dot(db, w_ref[...], preferred_element_type=jnp.float32) + b_ref[...]
    )


def _make_windowed_basis():
    # torch.hamming_window(200) (periodic), zero-padded (centered) to n_fft=256,
    # folded into the DFT basis rows: basis = diag(win) @ [cos | -sin].
    n_w = jnp.arange(WIN_LEN, dtype=jnp.float32)
    win = 0.54 - 0.46 * jnp.cos(2.0 * jnp.pi * n_w / WIN_LEN)
    left = (N_FFT - WIN_LEN) // 2
    win = jnp.pad(win, (left, N_FFT - WIN_LEN - left))          # (256,)

    n = jnp.arange(N_FFT, dtype=jnp.float32)[:, None]
    k = jnp.arange(N_BINS, dtype=jnp.float32)[None, :]
    ang = 2.0 * jnp.pi * n * k / N_FFT
    cos_mat = jnp.cos(ang) * win[:, None]
    sin_mat = -jnp.sin(ang) * win[:, None]
    pad = ((0, 0), (0, N_PAD - N_BINS))                          # 129 -> 256 lanes
    cos_mat = jnp.pad(cos_mat, pad)
    sin_mat = jnp.pad(sin_mat, pad)
    return jnp.concatenate([cos_mat, sin_mat], axis=1)           # (256, 512)


def _frame_signal(x2d):
    # torch.stft(center=True, pad_mode='reflect') framing; raw frames (no window).
    # NOTE: this JAX gather materializes (B, n_frames, 256) in HBM (~2.56x the
    # signal bytes).
    # TODO(synk): read overlapping windows in-kernel (hop-blocked signal + 3
    # shifted matmuls) to cut HBM traffic ~2x.
    B, T = x2d.shape
    pad = N_FFT // 2
    xp = jnp.pad(x2d, ((0, 0), (pad, pad)), mode="reflect")      # requires T > 128
    n_frames = 1 + T // HOP
    idx = jnp.arange(n_frames)[:, None] * HOP + jnp.arange(N_FFT)[None, :]
    return xp[:, idx], n_frames                                  # (B, n_frames, 256)


def freq_embed(x, proj_w, proj_b, *, tile_r=TILE_R):
    """x: (B, ..., T) float32; proj_w: (OUT_DIM, N_BINS); proj_b: (OUT_DIM,)."""
    x2d = x.reshape(x.shape[0], x.shape[-1]).astype(jnp.float32)
    frames, n_frames = _frame_signal(x2d)
    B = x2d.shape[0]
    R = B * n_frames
    frames = frames.reshape(R, N_FFT)

    # Row tiling: largest tile <= tile_r (multiple of 8); zero-pad R to a multiple.
    tr = min(tile_r, max(8, ((R + 7) // 8) * 8))
    r_pad = ((R + tr - 1) // tr) * tr
    if r_pad != R:
        frames = jnp.pad(frames, ((0, r_pad - R), (0, 0)))

    basis = _make_windowed_basis()                                # (256, 512)
    w_t = jnp.pad(proj_w.T.astype(jnp.float32),
                  ((0, N_PAD - N_BINS), (0, 0)))                  # (256, 128)
    b = proj_b.reshape(1, OUT_DIM).astype(jnp.float32)

    out = pl.pallas_call(
        _freq_embed_kernel,
        out_shape=jax.ShapeDtypeStruct((r_pad, OUT_DIM), jnp.float32),
        grid=(r_pad // tr,),
        in_specs=[
            pl.BlockSpec((tr, N_FFT), lambda i: (i, 0)),          # streamed tiles
            pl.BlockSpec((N_FFT, 2 * N_PAD), lambda i: (0, 0)),   # resident basis
            pl.BlockSpec((N_PAD, OUT_DIM), lambda i: (0, 0)),     # resident weight
            pl.BlockSpec((1, OUT_DIM), lambda i: (0, 0)),         # resident bias
        ],
        out_specs=pl.BlockSpec((tr, OUT_DIM), lambda i: (i, 0)),
        compiler_params=pltpu.CompilerParams(
            dimension_semantics=("parallel",)),
    )(frames, basis, w_t, b)

    return out[:R].reshape(B, n_frames, OUT_DIM)


if __name__ == "__main__":
    key = jax.random.PRNGKey(0)
    k_x, k_w, k_b = jax.random.split(key, 3)

    B, T = 2, 800                        # 9 STFT frames per batch element
    x = jax.random.normal(k_x, (B, 1, T), dtype=jnp.float32)

    # Deterministic synthetic nn.Linear(129, 128) parameters.
    proj_w = jax.random.normal(k_w, (OUT_DIM, N_BINS), dtype=jnp.float32) * 0.05
    proj_b = jax.random.normal(k_b, (OUT_DIM,), dtype=jnp.float32) * 0.05

    y = freq_embed(x, proj_w, proj_b)
    jax.block_until_ready(y)
    assert y.shape == (B, 1 + T // HOP, OUT_DIM), y.shape
    print("KERNEL_OK")
</pallas_src>

<mosaic_0001>
module attributes {stable_mosaic.version = 11 : i64} {
  func.func @_freq_embed_kernel(%arg0: i32, %arg1: memref<24x256xf32, #tpu.memory_space<vmem>>, %arg2: memref<256x512xf32, #tpu.memory_space<vmem>>, %arg3: memref<256x128xf32, #tpu.memory_space<vmem>>, %arg4: memref<1x128xf32, #tpu.memory_space<vmem>>, %arg5: memref<24x128xf32, #tpu.memory_space<vmem>>) attributes {dimension_semantics = [#tpu.dimension_semantics<parallel>], iteration_bounds = array<i64: 1>, scalar_prefetch = 0 : i64, scratch_operands = 0 : i64, tpu.core_type = #tpu.core_type<tc>, window_params = [{transform_indices = @transform_0, window_bounds = array<i64: 24, 256>}, {pipeline_mode = #tpu.pipeline_mode<synchronous>, transform_indices = @transform_1, window_bounds = array<i64: 256, 512>}, {pipeline_mode = #tpu.pipeline_mode<synchronous>, transform_indices = @transform_2, window_bounds = array<i64: 256, 128>}, {pipeline_mode = #tpu.pipeline_mode<synchronous>, transform_indices = @transform_3, window_bounds = array<i64: 1, 128>}, {transform_indices = @transform_4, window_bounds = array<i64: 24, 128>}]} {
    %c0 = arith.constant 0 : index
    %c0_0 = arith.constant 0 : index
    %0 = vector.load %arg1[%c0, %c0_0] : memref<24x256xf32, #tpu.memory_space<vmem>>, vector<24x256xf32>
    %c0_1 = arith.constant 0 : index
    %c0_2 = arith.constant 0 : index
    %1 = vector.load %arg2[%c0_1, %c0_2] : memref<256x512xf32, #tpu.memory_space<vmem>>, vector<256x512xf32>
    %cst = arith.constant dense<0.000000e+00> : vector<24x512xf32>
    %2 = tpu.matmul %0, %1, %cst {dimension_numbers = #tpu.dot_dimension_numbers<[1], [0], [0], [1], [0, 0, 1, 1], [], []>} : vector<24x256xf32>, vector<256x512xf32>, vector<24x512xf32> -> vector<24x512xf32>
    %3 = vector.extract_strided_slice %2 {offsets = [0, 0], sizes = [24, 256], strides = [1, 1]} : vector<24x512xf32> to vector<24x256xf32>
    %4 = vector.extract_strided_slice %2 {offsets = [0, 256], sizes = [24, 256], strides = [1, 1]} : vector<24x512xf32> to vector<24x256xf32>
    %5 = arith.mulf %3, %3 : vector<24x256xf32>
    %6 = arith.mulf %4, %4 : vector<24x256xf32>
    %7 = arith.addf %5, %6 : vector<24x256xf32>
    %cst_3 = arith.constant 1.000000e-30 : f32
    %8 = vector.broadcast %cst_3 : f32 to vector<24x256xf32>
    %9 = arith.maximumf %7, %8 : vector<24x256xf32>
    %10 = math.log %9 : vector<24x256xf32>
    %cst_4 = arith.constant 4.34294462 : f32
    %11 = vector.broadcast %cst_4 : f32 to vector<24x256xf32>
    %12 = arith.mulf %11, %10 : vector<24x256xf32>
    %c0_5 = arith.constant 0 : index
    %c0_6 = arith.constant 0 : index
    %13 = vector.load %arg3[%c0_5, %c0_6] : memref<256x128xf32, #tpu.memory_space<vmem>>, vector<256x128xf32>
    %cst_7 = arith.constant dense<0.000000e+00> : vector<24x128xf32>
    %14 = tpu.matmul %12, %13, %cst_7 {dimension_numbers = #tpu.dot_dimension_numbers<[1], [0], [0], [1], [0, 0, 1, 1], [], []>} : vector<24x256xf32>, vector<256x128xf32>, vector<24x128xf32> -> vector<24x128xf32>
    %c0_8 = arith.constant 0 : index
    %c0_9 = arith.constant 0 : index
    %15 = vector.load %arg4[%c0_8, %c0_9] : memref<1x128xf32, #tpu.memory_space<vmem>>, vector<1x128xf32>
    %16 = vector.broadcast %15 : vector<1x128xf32> to vector<24x128xf32>
    %17 = arith.addf %14, %16 : vector<24x128xf32>
    %c0_10 = arith.constant 0 : index
    %c0_11 = arith.constant 0 : index
    %18 = vector.load %arg5[%c0_10, %c0_11] : memref<24x128xf32, #tpu.memory_space<vmem>>, vector<24x128xf32>
    tpu.vector_store %arg5[%c0_10, %c0_11], %17 {strides = array<i32>} : memref<24x128xf32, #tpu.memory_space<vmem>>, vector<24x128xf32>,
    return
  }
  func.func @transform_0(%arg0: i32) -> (i32, i32) {
    %c0_i32 = arith.constant 0 : i32
    %c0_i32_0 = arith.constant 0 : i32
    return %arg0, %c0_i32 : i32, i32
  }
  func.func @transform_1(%arg0: i32) -> (i32, i32) {
    %c0_i32 = arith.constant 0 : i32
    %c0_i32_0 = arith.constant 0 : i32
    %c0_i32_1 = arith.constant 0 : i32
    return %c0_i32, %c0_i32_0 : i32, i32
  }
  func.func @transform_2(%arg0: i32) -> (i32, i32) {
    %c0_i32 = arith.constant 0 : i32
    %c0_i32_0 = arith.constant 0 : i32
    %c0_i32_1 = arith.constant 0 : i32
    return %c0_i32, %c0_i32_0 : i32, i32
  }
  func.func @transform_3(%arg0: i32) -> (i32, i32) {
    %c0_i32 = arith.constant 0 : i32
    %c0_i32_0 = arith.constant 0 : i32
    %c0_i32_1 = arith.constant 0 : i32
    return %c0_i32, %c0_i32_0 : i32, i32
  }
  func.func @transform_4(%arg0: i32) -> (i32, i32) {
    %c0_i32 = arith.constant 0 : i32
    %c0_i32_0 = arith.constant 0 : i32
    return %arg0, %c0_i32 : i32, i32
  }
}

</mosaic_0001>

<llo_original>
// kernel: tpu_custom_call.1
$region0: #{tpu_custom_call.1}
  #allocation0 [shape = 'u32[]', space=smem, size = 0x4, offset = 0x4, fixed_abs, tag = 'smem constant byte address 0x4 - core index']
  #allocation1 [shape = 'u32[144,128]{1,0:T(1,128)}', space=vmem, size = 0x12000, scoped, tag = 'internal scratch']
  %s0 = inlined_call_operand.hbm [shape: f32[24,256], index: 0, kind: input, shape index: {}]
  %s1 = inlined_call_operand.hbm [shape: f32[256,512], index: 1, kind: input, shape index: {}]
  %s2 = inlined_call_operand.hbm [shape: f32[256,128], index: 2, kind: input, shape index: {}]
  %s3 = inlined_call_operand.vmem [shape: f32[1,128], index: 3, kind: input, shape index: {}]
  %s4 = inlined_call_operand.hbm [shape: f32[24,128], index: 4, kind: output, shape index: {}]
  %s5 = sld [smem:[#allocation0]]
  $region38: #{tpu_custom_call.1} parent=0
    _
  %s7 = ssub.s32 1, %s5
  %s8 = scalar_select 0, %s7, %s5
  $region1: #{tpu_custom_call.1} parent=0
    #allocation2 [shape = 'u8[24576]{0}', space=vmem, size = 0x6000, scoped, tag = 'input window, operand 0, single buffered']
    #allocation3 [shape = 's32[1]{0}', space=sflag, size = 0x4, scoped, tag = 'scoped memory for tpu_custom_call.1']
    #allocation4 [shape = 's32[1]{0}', space=sflag, size = 0x4, scoped, tag = 'scoped memory for tpu_custom_call.1']
    #allocation5 [shape = 'u8[524288]{0}', space=vmem, size = 0x80000, scoped, tag = 'input window, operand 1, single buffered']
    #allocation6 [shape = 's32[1]{0}', space=sflag, size = 0x4, scoped, tag = 'scoped memory for tpu_custom_call.1']
    #allocation7 [shape = 'u8[131072]{0}', space=vmem, size = 0x20000, scoped, tag = 'input window, operand 2, single buffered']
    #allocation8 [shape = 'u8[12288]{0}', space=vmem, size = 0x3000, scoped, tag = 'output window, operand 0, single buffered']
    %9 = vsyncpa [#allocation3], 0
    %10 = vsyncpa [#allocation6], 0
    %11 = vsyncpa [#allocation4], 0
    // Predicated region
    $region2: #{tpu_custom_call.1} parent=1 // pred_check
      _
    $region3: #{tpu_custom_call.1} parent=1 // pred_check_branch
      %13 = sbr.rel (0) target = $region5
    $region4: #{tpu_custom_call.1} parent=1 // pred_region
      %s15 = ssub.s32 768, 768
      %16 = vsyncadd [#allocation3], %s15
      %s17 = sshll.u32 [#allocation2], 4
      %s18 = int_to_ptr.vmem [resolvable:$true] %s17
      %23 = dma.hbm_to_vmem [thread:$0]  %s0, 768, %s18, [#allocation3], 256, 256, 16
    $region5: #{tpu_custom_call.1} parent=1 // pred_fallthru
      _
    // Predicated region
    $region6: #{tpu_custom_call.1} parent=1 // pred_check
      _
    $region7: #{tpu_custom_call.1} parent=1 // pred_check_branch
      %25 = sbr.rel (0) target = $region9
    $region8: #{tpu_custom_call.1} parent=1 // pred_region
      %s27 = ssub.s32 16384, 16384
      %28 = vsyncadd [#allocation6], %s27
      %s29 = sshll.u32 [#allocation5], 4
      %s30 = int_to_ptr.vmem [resolvable:$true] %s29
      %35 = dma.hbm_to_vmem [thread:$0]  %s1, 16384, %s30, [#allocation6], 512, 512, 32
    $region9: #{tpu_custom_call.1} parent=1 // pred_fallthru
      _
    // Predicated region
    $region10: #{tpu_custom_call.1} parent=1 // pred_check
      _
    $region11: #{tpu_custom_call.1} parent=1 // pred_check_branch
      %37 = sbr.rel (0) target = $region13
    $region12: #{tpu_custom_call.1} parent=1 // pred_region
      %s39 = ssub.s32 4096, 4096
      %40 = vsyncadd [#allocation6], %s39
      %s41 = sshll.u32 [#allocation7], 4
      %s42 = int_to_ptr.vmem [resolvable:$true] %s41
      %47 = dma.hbm_to_vmem [thread:$0]  %s2, 4096, %s42, [#allocation6], 128, 128, 8
    $region13: #{tpu_custom_call.1} parent=1 // pred_fallthru
      _
    // Predicated region
    $region14: #{tpu_custom_call.1} parent=1 // pred_check
      _
    $region15: #{tpu_custom_call.1} parent=1 // pred_check_branch
      %49 = sbr.rel (0) target = $region17
    $region16: #{tpu_custom_call.1} parent=1 // pred_region
      _
    $region17: #{tpu_custom_call.1} parent=1 // pred_fallthru
      _
    // Predicated region
    $region18: #{tpu_custom_call.1} parent=1 // pred_check
      _
    $region19: #{tpu_custom_call.1} parent=1 // pred_check_branch
      %51 = sbr.rel (0) target = $region21
    $region20: #{tpu_custom_call.1} parent=1 // pred_region
      %52 = dma.done [#allocation3], 768
    $region21: #{tpu_custom_call.1} parent=1 // pred_fallthru
      _
    // Predicated region
    $region22: #{tpu_custom_call.1} parent=1 // pred_check
      _
    $region23: #{tpu_custom_call.1} parent=1 // pred_check_branch
      %54 = sbr.rel (0) target = $region25
    $region24: #{tpu_custom_call.1} parent=1 // pred_region
      %55 = dma.done [#allocation6], 16384
    $region25: #{tpu_custom_call.1} parent=1 // pred_fallthru
      _
    // Predicated region
    $region26: #{tpu_custom_call.1} parent=1 // pred_check
      _
    $region27: #{tpu_custom_call.1} parent=1 // pred_check_branch
      %57 = sbr.rel (0) target = $region29
    $region28: #{tpu_custom_call.1} parent=1 // pred_region
      %58 = dma.done [#allocation6], 4096
    $region29: #{tpu_custom_call.1} parent=1 // pred_fallthru
      _
    %v59 = vld [vmem:[#allocation2] sm:$0xff]
    %v60 = vld [vmem:[#allocation2 + $0x8] sm:$0xff]
    %v61 = vld [vmem:[#allocation2 + $0x10] sm:$0xff]
    %v62 = vld [vmem:[#allocation2 + $0x18] sm:$0xff]
    %v63 = vld [vmem:[#allocation2 + $0x20] sm:$0xff]
    %v64 = vld [vmem:[#allocation2 + $0x28] sm:$0xff]
    %v65 = vld [vmem:[#allocation5] sm:$0xff]
    %v66 = vld [vmem:[#allocation5 + $0x8] sm:$0xff]
    %v67 = vld [vmem:[#allocation5 + $0x10] sm:$0xff]
    %v68 = vld [vmem:[#allocation5 + $0x18] sm:$0xff]
    %v69 = vld [vmem:[#allocation5 + $0x20] sm:$0xff]
    %v70 = vld [vmem:[#allocation5 + $0x28] sm:$0xff]
    %v71 = vld [vmem:[#allocation5 + $0x30] sm:$0xff]
    %v72 = vld [vmem:[#allocation5 + $0x38] sm:$0xff]
    %v73 = vld [vmem:[#allocation5 + $0x40] sm:$0xff]
    %v74 = vld [vmem:[#allocation5 + $0x48] sm:$0xff]
    %v75 = vld [vmem:[#allocation5 + $0x50] sm:$0xff]
    %v76 = vld [vmem:[#allocation5 + $0x58] sm:$0xff]
    %v77 = vld [vmem:[#allocation5 + $0x60] sm:$0xff]
    %v78 = vld [vmem:[#allocation5 + $0x68] sm:$0xff]
    %v79 = vld [vmem:[#allocation5 + $0x70] sm:$0xff]
    %v80 = vld [vmem:[#allocation5 + $0x78] sm:$0xff]
    %v81 = vld [vmem:[#allocation5 + $0x80] sm:$0xff]
    %v82 = vld [vmem:[#allocation5 + $0x88] sm:$0xff]
    %v83 = vld [vmem:[#allocation5 + $0x90] sm:$0xff]
    %v84 = vld [vmem:[#allocation5 + $0x98] sm:$0xff]
    %v85 = vld [vmem:[#allocation5 + $0xa0] sm:$0xff]
    %v86 = vld [vmem:[#allocation5 + $0xa8] sm:$0xff]
    %v87 = vld [vmem:[#allocation5 + $0xb0] sm:$0xff]
    %v88 = vld [vmem:[#allocation5 + $0xb8] sm:$0xff]
    %v89 = vld [vmem:[#allocation5 + $0xc0] sm:$0xff]
    %v90 = vld [vmem:[#allocation5 + $0xc8] sm:$0xff]
    %v91 = vld [vmem:[#allocation5 + $0xd0] sm:$0xff]
    %v92 = vld [vmem:[#allocation5 + $0xd8] sm:$0xff]
    %v93 = vld [vmem:[#allocation5 + $0xe0] sm:$0xff]
    %v94 = vld [vmem:[#allocation5 + $0xe8] sm:$0xff]
    %v95 = vld [vmem:[#allocation5 + $0xf0] sm:$0xff]
    %v96 = vld [vmem:[#allocation5 + $0xf8] sm:$0xff]
    %v97 = vld [vmem:[#allocation5 + $0x100] sm:$0xff]
    %v98 = vld [vmem:[#allocation5 + $0x108] sm:$0xff]
    %v99 = vld [vmem:[#allocation5 + $0x110] sm:$0xff]
    %v100 = vld [vmem:[#allocation5 + $0x118] sm:$0xff]
    %v101 = vld [vmem:[#allocation5 + $0x120] sm:$0xff]
    %v102 = vld [vmem:[#allocation5 + $0x128] sm:$0xff]
    %v103 = vld [vmem:[#allocation5 + $0x130] sm:$0xff]
    %v104 = vld [vmem:[#allocation5 + $0x138] sm:$0xff]
    %v105 = vld [vmem:[#allocation5 + $0x140] sm:$0xff]
    %v106 = vld [vmem:[#allocation5 + $0x148] sm:$0xff]
    %v107 = vld [vmem:[#allocation5 + $0x150] sm:$0xff]
    %v108 = vld [vmem:[#allocation5 + $0x158] sm:$0xff]
    %v109 = vld [vmem:[#allocation5 + $0x160] sm:$0xff]
    %v110 = vld [vmem:[#allocation5 + $0x168] sm:$0xff]
    %v111 = vld [vmem:[#allocation5 + $0x170] sm:$0xff]
    %v112 = vld [vmem:[#allocation5 + $0x178] sm:$0xff]
    %v113 = vld [vmem:[#allocation5 + $0x180] sm:$0xff]
    %v114 = vld [vmem:[#allocation5 + $0x188] sm:$0xff]
    %v115 = vld [vmem:[#allocation5 + $0x190] sm:$0xff]
    %v116 = vld [vmem:[#allocation5 + $0x198] sm:$0xff]
    %v117 = vld [vmem:[#allocation5 + $0x1a0] sm:$0xff]
    %v118 = vld [vmem:[#allocation5 + $0x1a8] sm:$0xff]
    %v119 = vld [vmem:[#allocation5 + $0x1b0] sm:$0xff]
    %v120 = vld [vmem:[#allocation5 + $0x1b8] sm:$0xff]
    %v121 = vld [vmem:[#allocation5 + $0x1c0] sm:$0xff]
    %v122 = vld [vmem:[#allocation5 + $0x1c8] sm:$0xff]
    %v123 = vld [vmem:[#allocation5 + $0x1d0] sm:$0xff]
    %v124 = vld [vmem:[#allocation5 + $0x1d8] sm:$0xff]
    %v125 = vld [vmem:[#allocation5 + $0x1e0] sm:$0xff]
    %v126 = vld [vmem:[#allocation5 + $0x1e8] sm:$0xff]
    %v127 = vld [vmem:[#allocation5 + $0x1f0] sm:$0xff]
    %v128 = vld [vmem:[#allocation5 + $0x1f8] sm:$0xff]
    %v129 = vld [vmem:[#allocation5 + $0x200] sm:$0xff]
    %v130 = vld [vmem:[#allocation5 + $0x208] sm:$0xff]
    %v131 = vld [vmem:[#allocation5 + $0x210] sm:$0xff]
    %v132 = vld [vmem:[#allocation5 + $0x218] sm:$0xff]
    %v133 = vld [vmem:[#allocation5 + $0x220] sm:$0xff]
    %v134 = vld [vmem:[#allocation5 + $0x228] sm:$0xff]
    %v135 = vld [vmem:[#allocation5 + $0x230] sm:$0xff]
    %v136 = vld [vmem:[#allocation5 + $0x238] sm:$0xff]
    %v137 = vld [vmem:[#allocation5 + $0x240] sm:$0xff]
    %v138 = vld [vmem:[#allocation5 + $0x248] sm:$0xff]
    %v139 = vld [vmem:[#allocation5 + $0x250] sm:$0xff]
    %v140 = vld [vmem:[#allocation5 + $0x258] sm:$0xff]
    %v141 = vld [vmem:[#allocation5 + $0x260] sm:$0xff]
    %v142 = vld [vmem:[#allocation5 + $0x268] sm:$0xff]
    %v143 = vld [vmem:[#allocation5 + $0x270] sm:$0xff]
    %v144 = vld [vmem:[#allocation5 + $0x278] sm:$0xff]
    %v145 = vld [vmem:[#allocation5 + $0x280] sm:$0xff]
    %v146 = vld [vmem:[#allocation5 + $0x288] sm:$0xff]
    %v147 = vld [vmem:[#allocation5 + $0x290] sm:$0xff]
    %v148 = vld [vmem:[#allocation5 + $0x298] sm:$0xff]
    %v149 = vld [vmem:[#allocation5 + $0x2a0] sm:$0xff]
    %v150 = vld [vmem:[#allocation5 + $0x2a8] sm:$0xff]
    %v151 = vld [vmem:[#allocation5 + $0x2b0] sm:$0xff]
    %v152 = vld [vmem:[#allocation5 + $0x2b8] sm:$0xff]
    %v153 = vld [vmem:[#allocation5 + $0x2c0] sm:$0xff]
    %v154 = vld [vmem:[#allocation5 + $0x2c8] sm:$0xff]
    %v155 = vld [vmem:[#allocation5 + $0x2d0] sm:$0xff]
    %v156 = vld [vmem:[#allocation5 + $0x2d8] sm:$0xff]
    %v157 = vld [vmem:[#allocation5 + $0x2e0] sm:$0xff]
    %v158 = vld [vmem:[#allocation5 + $0x2e8] sm:$0xff]
    %v159 = vld [vmem:[#allocation5 + $0x2f0] sm:$0xff]
    %v160 = vld [vmem:[#allocation5 + $0x2f8] sm:$0xff]
    %v161 = vld [vmem:[#allocation5 + $0x300] sm:$0xff]
    %v162 = vld [vmem:[#allocation5 + $0x308] sm:$0xff]
    %v163 = vld [vmem:[#allocation5 + $0x310] sm:$0xff]
    %v164 = vld [vmem:[#allocation5 + $0x318] sm:$0xff]
    %v165 = vld [vmem:[#allocation5 + $0x320] sm:$0xff]
    %v166 = vld [vmem:[#allocation5 + $0x328] sm:$0xff]
    %v167 = vld [vmem:[#allocation5 + $0x330] sm:$0xff]
    %v168 = vld [vmem:[#allocation5 + $0x338] sm:$0xff]
    %v169 = vld [vmem:[#allocation5 + $0x340] sm:$0xff]
    %v170 = vld [vmem:[#allocation5 + $0x348] sm:$0xff]
    %v171 = vld [vmem:[#allocation5 + $0x350] sm:$0xff]
    %v172 = vld [vmem:[#allocation5 + $0x358] sm:$0xff]
    %v173 = vld [vmem:[#allocation5 + $0x360] sm:$0xff]
    %v174 = vld [vmem:[#allocation5 + $0x368] sm:$0xff]
    %v175 = vld [vmem:[#allocation5 + $0x370] sm:$0xff]
    %v176 = vld [vmem:[#allocation5 + $0x378] sm:$0xff]
    %v177 = vld [vmem:[#allocation5 + $0x380] sm:$0xff]
    %v178 = vld [vmem:[#allocation5 + $0x388] sm:$0xff]
    %v179 = vld [vmem:[#allocation5 + $0x390] sm:$0xff]
    %v180 = vld [vmem:[#allocation5 + $0x398] sm:$0xff]
    %v181 = vld [vmem:[#allocation5 + $0x3a0] sm:$0xff]
    %v182 = vld [vmem:[#allocation5 + $0x3a8] sm:$0xff]
    %v183 = vld [vmem:[#allocation5 + $0x3b0] sm:$0xff]
    %v184 = vld [vmem:[#allocation5 + $0x3b8] sm:$0xff]
    %v185 = vld [vmem:[#allocation5 + $0x3c0] sm:$0xff]
    %v186 = vld [vmem:[#allocation5 + $0x3c8] sm:$0xff]
    %v187 = vld [vmem:[#allocation5 + $0x3d0] sm:$0xff]
    %v188 = vld [vmem:[#allocation5 + $0x3d8] sm:$0xff]
    %v189 = vld [vmem:[#allocation5 + $0x3e0] sm:$0xff]
    %v190 = vld [vmem:[#allocation5 + $0x3e8] sm:$0xff]
    %v191 = vld [vmem:[#allocation5 + $0x3f0] sm:$0xff]
    %v192 = vld [vmem:[#allocation5 + $0x3f8] sm:$0xff]
    %193 = vmatprep.subr.mxu0 %v66
    %194 = vmatpush1.msra.mxu0 %v65
    %195 = vmatprep.subr.mxu0 %v70
    %196 = vmatpush1.msra.mxu0 %v69
    %197 = vmatprep.subr.mxu0 %v74
    %198 = vmatpush1.msra.mxu0 %v73
    %199 = vmatprep.subr.mxu0 %v78
    %200 = vmatpush1.msra.mxu0 %v77
    %201 = vmatprep.subr.mxu0 %v82
    %202 = vmatpush1.msra.mxu0 %v81
    %203 = vmatprep.subr.mxu0 %v86
    %204 = vmatpush1.msra.mxu0 %v85
    %205 = vmatprep.subr.mxu0 %v90
    %206 = vmatpush1.msra.mxu0 %v89
    %207 = vmatprep.subr.mxu0 %v94
    %208 = vmatpush1.msra.mxu0 %v93
    %209 = vmatprep.subr.mxu0 %v98
    %210 = vmatpush1.msra.mxu0 %v97
    %211 = vmatprep.subr.mxu0 %v102
    %212 = vmatpush1.msra.mxu0 %v101
    %213 = vmatprep.subr.mxu0 %v106
    %214 = vmatpush1.msra.mxu0 %v105
    %215 = vmatprep.subr.mxu0 %v110
    %216 = vmatpush1.msra.mxu0 %v109
    %217 = vmatprep.subr.mxu0 %v114
    %218 = vmatpush1.msra.mxu0 %v113
    %219 = vmatprep.subr.mxu0 %v118
    %220 = vmatpush1.msra.mxu0 %v117
    %221 = vmatprep.subr.mxu0 %v122
    %222 = vmatpush1.msra.mxu0 %v121
    %223 = vmatprep.subr.mxu0 %v126
    %224 = vmatpush1.msra.mxu0 %v125
    %225 = vmatprep.subr.mxu0 %v130
    %226 = vmatpush1.msra.mxu0 %v129
    %227 = vmatprep.subr.mxu0 %v134
    %228 = vmatpush1.msra.mxu0 %v133
    %229 = vmatprep.subr.mxu0 %v138
    %230 = vmatpush1.msra.mxu0 %v137
    %231 = vmatprep.subr.mxu0 %v142
    %232 = vmatpush1.msra.mxu0 %v141
    %233 = vmatprep.subr.mxu0 %v146
    %234 = vmatpush1.msra.mxu0 %v145
    %235 = vmatprep.subr.mxu0 %v150
    %236 = vmatpush1.msra.mxu0 %v149
    %237 = vmatprep.subr.mxu0 %v154
    %238 = vmatpush1.msra.mxu0 %v153
    %239 = vmatprep.subr.mxu0 %v158
    %240 = vmatpush1.msra.mxu0 %v157
    %241 = vmatprep.subr.mxu0 %v162
    %242 = vmatpush1.msra.mxu0 %v161
    %243 = vmatprep.subr.mxu0 %v166
    %244 = vmatpush1.msra.mxu0 %v165
    %245 = vmatprep.subr.mxu0 %v170
    %246 = vmatpush1.msra.mxu0 %v169
    %247 = vmatprep.subr.mxu0 %v174
    %248 = vmatpush1.msra.mxu0 %v173
    %249 = vmatprep.subr.mxu0 %v178
    %250 = vmatpush1.msra.mxu0 %v177
    %251 = vmatprep.subr.mxu0 %v182
    %252 = vmatpush1.msra.mxu0 %v181
    %253 = vmatprep.subr.mxu0 %v186
    %254 = vmatpush1.msra.mxu0 %v185
    %255 = vmatprep.subr.mxu0 %v190
    %256 = vmatpush1.msra.mxu0 %v189
    %257 = vmatprep.mubr.f32.mxu0 %v60
    %258 = vmatmul.mubr.f32.gmra.mrb[0].mxu0 %v59
    %v259 = vpop.f32.mrb[0].mxu0
    %v260 = vadd.f32 0.0, %v259
    %v261 = vpop.f32.mrb[0].mxu0
    %v262 = vadd.f32 0.0, %v261
    %263 = vmatprep.mubr.f32.mxu0 %v62
    %264 = vmatmul.mubr.f32.gmra.mrb[0].mxu0 %v61
    %v265 = vpop.f32.mrb[0].mxu0
    %v266 = vadd.f32 0.0, %v265
    %v267 = vpop.f32.mrb[0].mxu0
    %v268 = vadd.f32 0.0, %v267
    %269 = vmatprep.mubr.f32.mxu0 %v64
    %270 = vmatmul.mubr.f32.gmra.mrb[0].mxu0 %v63
    %v271 = vpop.f32.mrb[0].mxu0
    %v272 = vadd.f32 0.0, %v271
    %v273 = vpop.f32.mrb[0].mxu0
    %v274 = vadd.f32 0.0, %v273
    %275 = vdwg.mxu0
    %276 = vmatprep.subr.mxu0 %v68
    %277 = vmatpush1.msra.mxu0 %v67
    %278 = vmatprep.subr.mxu0 %v72
    %279 = vmatpush1.msra.mxu0 %v71
    %280 = vmatprep.subr.mxu0 %v76
    %281 = vmatpush1.msra.mxu0 %v75
    %282 = vmatprep.subr.mxu0 %v80
    %283 = vmatpush1.msra.mxu0 %v79
    %284 = vmatprep.subr.mxu0 %v84
    %285 = vmatpush1.msra.mxu0 %v83
    %286 = vmatprep.subr.mxu0 %v88
    %287 = vmatpush1.msra.mxu0 %v87
    %288 = vmatprep.subr.mxu0 %v92
    %289 = vmatpush1.msra.mxu0 %v91
    %290 = vmatprep.subr.mxu0 %v96
    %291 = vmatpush1.msra.mxu0 %v95
    %292 = vmatprep.subr.mxu0 %v100
    %293 = vmatpush1.msra.mxu0 %v99
    %294 = vmatprep.subr.mxu0 %v104
    %295 = vmatpush1.msra.mxu0 %v103
    %296 = vmatprep.subr.mxu0 %v108
    %297 = vmatpush1.msra.mxu0 %v107
    %298 = vmatprep.subr.mxu0 %v112
    %299 = vmatpush1.msra.mxu0 %v111
    %300 = vmatprep.subr.mxu0 %v116
    %301 = vmatpush1.msra.mxu0 %v115
    %302 = vmatprep.subr.mxu0 %v120
    %303 = vmatpush1.msra.mxu0 %v119
    %304 = vmatprep.subr.mxu0 %v124
    %305 = vmatpush1.msra.mxu0 %v123
    %306 = vmatprep.subr.mxu0 %v128
    %307 = vmatpush1.msra.mxu0 %v127
    %308 = vmatprep.subr.mxu0 %v132
    %309 = vmatpush1.msra.mxu0 %v131
    %310 = vmatprep.subr.mxu0 %v136
    %311 = vmatpush1.msra.mxu0 %v135
    %312 = vmatprep.subr.mxu0 %v140
    %313 = vmatpush1.msra.mxu0 %v139
    %314 = vmatprep.subr.mxu0 %v144
    %315 = vmatpush1.msra.mxu0 %v143
    %316 = vmatprep.subr.mxu0 %v148
    %317 = vmatpush1.msra.mxu0 %v147
    %318 = vmatprep.subr.mxu0 %v152
    %319 = vmatpush1.msra.mxu0 %v151
    %320 = vmatprep.subr.mxu0 %v156
    %321 = vmatpush1.msra.mxu0 %v155
    %322 = vmatprep.subr.mxu0 %v160
    %323 = vmatpush1.msra.mxu0 %v159
    %324 = vmatprep.subr.mxu0 %v164
    %325 = vmatpush1.msra.mxu0 %v163
    %326 = vmatprep.subr.mxu0 %v168
    %327 = vmatpush1.msra.mxu0 %v167
    %328 = vmatprep.subr.mxu0 %v172
    %329 = vmatpush1.msra.mxu0 %v171
    %330 = vmatprep.subr.mxu0 %v176
    %331 = vmatpush1.msra.mxu0 %v175
    %332 = vmatprep.subr.mxu0 %v180
    %333 = vmatpush1.msra.mxu0 %v179
    %334 = vmatprep.subr.mxu0 %v184
    %335 = vmatpush1.msra.mxu0 %v183
    %336 = vmatprep.subr.mxu0 %v188
    %337 = vmatpush1.msra.mxu0 %v187
    %338 = vmatprep.subr.mxu0 %v192
    %339 = vmatpush1.msra.mxu0 %v191
    %340 = vmatprep.mubr.f32.mxu0 %v60
    %341 = vmatmul.mubr.f32.gmra.mrb[0].mxu0 %v59
    %v342 = vpop.f32.mrb[0].mxu0
    %v343 = vadd.f32 0.0, %v342
    %v344 = vpop.f32.mrb[0].mxu0
    %v345 = vadd.f32 0.0, %v344
    %346 = vmatprep.mubr.f32.mxu0 %v62
    %347 = vmatmul.mubr.f32.gmra.mrb[0].mxu0 %v61
    %v348 = vpop.f32.mrb[0].mxu0
    %v349 = vadd.f32 0.0, %v348
    %v350 = vpop.f32.mrb[0].mxu0
    %v351 = vadd.f32 0.0, %v350
    %352 = vmatprep.mubr.f32.mxu0 %v64
    %353 = vmatmul.mubr.f32.gmra.mrb[0].mxu0 %v63
    %v354 = vpop.f32.mrb[0].mxu0
    %v355 = vadd.f32 0.0, %v354
    %v356 = vpop.f32.mrb[0].mxu0
    %v357 = vadd.f32 0.0, %v356
    %358 = vdwg.mxu0
    %v359 = vmul.f32 %v260, %v260
    %v360 = vmul.f32 %v262, %v262
    %v361 = vmul.f32 %v266, %v266
    %v362 = vmul.f32 %v268, %v268
    %v363 = vmul.f32 %v272, %v272
    %v364 = vmul.f32 %v274, %v274
    %v365 = vmul.f32 %v343, %v343
    %v366 = vmul.f32 %v345, %v345
    %v367 = vmul.f32 %v349, %v349
    %v368 = vmul.f32 %v351, %v351
    %v369 = vmul.f32 %v355, %v355
    %v370 = vmul.f32 %v357, %v357
    %v371 = vadd.f32 %v359, %v365
    %v372 = vadd.f32 %v360, %v366
    %v373 = vadd.f32 %v361, %v367
    %v374 = vadd.f32 %v362, %v368
    %v375 = vadd.f32 %v363, %v369
    %v376 = vadd.f32 %v364, %v370
    %v377 = vmax.f32 %v371, 1e-30
    %v378 = vmax.f32 %v372, 1e-30
    %v379 = vmax.f32 %v373, 1e-30
    %v380 = vmax.f32 %v374, 1e-30
    %v381 = vmax.f32 %v375, 1e-30
    %v382 = vmax.f32 %v376, 1e-30
    %v383 = vlog2.pop %v377
    %v384 = vmul.f32 %v383, 0.6931472
    %v385 = vlog2.pop %v378
    %v386 = vmul.f32 %v385, 0.6931472
    %v387 = vlog2.pop %v379
    %v388 = vmul.f32 %v387, 0.6931472
    %v389 = vlog2.pop %v380
    %v390 = vmul.f32 %v389, 0.6931472
    %v391 = vlog2.pop %v381
    %v392 = vmul.f32 %v391, 0.6931472
    %v393 = vlog2.pop %v382
    %v394 = vmul.f32 %v393, 0.6931472
    %v395 = vmul.f32 %v384, 4.3429446
    %v396 = vmul.f32 %v386, 4.3429446
    %v397 = vmul.f32 %v388, 4.3429446
    %v398 = vmul.f32 %v390, 4.3429446
    %v399 = vmul.f32 %v392, 4.3429446
    %v400 = vmul.f32 %v394, 4.3429446
    %v401 = vld [vmem:[#allocation7] sm:$0xff]
    %v402 = vld [vmem:[#allocation7 + $0x8] sm:$0xff]
    %v403 = vld [vmem:[#allocation7 + $0x10] sm:$0xff]
    %v404 = vld [vmem:[#allocation7 + $0x18] sm:$0xff]
    %v405 = vld [vmem:[#allocation7 + $0x20] sm:$0xff]
    %v406 = vld [vmem:[#allocation7 + $0x28] sm:$0xff]
    %v407 = vld [vmem:[#allocation7 + $0x30] sm:$0xff]
    %v408 = vld [vmem:[#allocation7 + $0x38] sm:$0xff]
    %v409 = vld [vmem:[#allocation7 + $0x40] sm:$0xff]
    %v410 = vld [vmem:[#allocation7 + $0x48] sm:$0xff]
    %v411 = vld [vmem:[#allocation7 + $0x50] sm:$0xff]
    %v412 = vld [vmem:[#allocation7 + $0x58] sm:$0xff]
    %v413 = vld [vmem:[#allocation7 + $0x60] sm:$0xff]
    %v414 = vld [vmem:[#allocation7 + $0x68] sm:$0xff]
    %v415 = vld [vmem:[#allocation7 + $0x70] sm:$0xff]
    %v416 = vld [vmem:[#allocation7 + $0x78] sm:$0xff]
    %v417 = vld [vmem:[#allocation7 + $0x80] sm:$0xff]
    %v418 = vld [vmem:[#allocation7 + $0x88] sm:$0xff]
    %v419 = vld [vmem:[#allocation7 + $0x90] sm:$0xff]
    %v420 = vld [vmem:[#allocation7 + $0x98] sm:$0xff]
    %v421 = vld [vmem:[#allocation7 + $0xa0] sm:$0xff]
    %v422 = vld [vmem:[#allocation7 + $0xa8] sm:$0xff]
    %v423 = vld [vmem:[#allocation7 + $0xb0] sm:$0xff]
    %v424 = vld [vmem:[#allocation7 + $0xb8] sm:$0xff]
    %v425 = vld [vmem:[#allocation7 + $0xc0] sm:$0xff]
    %v426 = vld [vmem:[#allocation7 + $0xc8] sm:$0xff]
    %v427 = vld [vmem:[#allocation7 + $0xd0] sm:$0xff]
    %v428 = vld [vmem:[#allocation7 + $0xd8] sm:$0xff]
    %v429 = vld [vmem:[#allocation7 + $0xe0] sm:$0xff]
    %v430 = vld [vmem:[#allocation7 + $0xe8] sm:$0xff]
    %v431 = vld [vmem:[#allocation7 + $0xf0] sm:$0xff]
    %v432 = vld [vmem:[#allocation7 + $0xf8] sm:$0xff]
    %v433 = vld [vmem:[%s3] sm:$0x1]
    %v435 = vlaneseq
    %v436 = vshrl.u32 %v435, 7
    %v437 = vsub.s32 0, %v436
    %v438 = vrot.slane %v433, %v437
    %440 = vmatprep.subr.mxu0 0.0
    %441 = vmatpush1.msra.mxu0 %v401
    %442 = vmatprep.subr.mxu0 0.0
    %443 = vmatpush1.msra.mxu0 %v402
    %444 = vmatprep.subr.mxu0 0.0
    %445 = vmatpush1.msra.mxu0 %v403
    %446 = vmatprep.subr.mxu0 0.0
    %447 = vmatpush1.msra.mxu0 %v404
    %448 = vmatprep.subr.mxu0 0.0
    %449 = vmatpush1.msra.mxu0 %v405
    %450 = vmatprep.subr.mxu0 0.0
    %451 = vmatpush1.msra.mxu0 %v406
    %452 = vmatprep.subr.mxu0 0.0
    %453 = vmatpush1.msra.mxu0 %v407
    %454 = vmatprep.subr.mxu0 0.0
    %455 = vmatpush1.msra.mxu0 %v408
    %456 = vmatprep.subr.mxu0 0.0
    %457 = vmatpush1.msra.mxu0 %v409
    %458 = vmatprep.subr.mxu0 0.0
    %459 = vmatpush1.msra.mxu0 %v410
    %460 = vmatprep.subr.mxu0 0.0
    %461 = vmatpush1.msra.mxu0 %v411
    %462 = vmatprep.subr.mxu0 0.0
    %463 = vmatpush1.msra.mxu0 %v412
    %464 = vmatprep.subr.mxu0 0.0
    %465 = vmatpush1.msra.mxu0 %v413
    %466 = vmatprep.subr.mxu0 0.0
    %467 = vmatpush1.msra.mxu0 %v414
    %468 = vmatprep.subr.mxu0 0.0
    %469 = vmatpush1.msra.mxu0 %v415
    %470 = vmatprep.subr.mxu0 0.0
    %471 = vmatpush1.msra.mxu0 %v416
    %472 = vmatprep.subr.mxu0 0.0
    %473 = vmatpush1.msra.mxu0 %v417
    %474 = vmatprep.subr.mxu0 0.0
    %475 = vmatpush1.msra.mxu0 %v418
    %476 = vmatprep.subr.mxu0 0.0
    %477 = vmatpush1.msra.mxu0 %v419
    %478 = vmatprep.subr.mxu0 0.0
    %479 = vmatpush1.msra.mxu0 %v420
    %480 = vmatprep.subr.mxu0 0.0
    %481 = vmatpush1.msra.mxu0 %v421
    %482 = vmatprep.subr.mxu0 0.0
    %483 = vmatpush1.msra.mxu0 %v422
    %484 = vmatprep.subr.mxu0 0.0
    %485 = vmatpush1.msra.mxu0 %v423
    %486 = vmatprep.subr.mxu0 0.0
    %487 = vmatpush1.msra.mxu0 %v424
    %488 = vmatprep.subr.mxu0 0.0
    %489 = vmatpush1.msra.mxu0 %v425
    %490 = vmatprep.subr.mxu0 0.0
    %491 = vmatpush1.msra.mxu0 %v426
    %492 = vmatprep.subr.mxu0 0.0
    %493 = vmatpush1.msra.mxu0 %v427
    %494 = vmatprep.subr.mxu0 0.0
    %495 = vmatpush1.msra.mxu0 %v428
    %496 = vmatprep.subr.mxu0 0.0
    %497 = vmatpush1.msra.mxu0 %v429
    %498 = vmatprep.subr.mxu0 0.0
    %499 = vmatpush1.msra.mxu0 %v430
    %500 = vmatprep.subr.mxu0 0.0
    %501 = vmatpush1.msra.mxu0 %v431
    %502 = vmatprep.subr.mxu0 0.0
    %503 = vmatpush1.msra.mxu0 %v432
    %504 = vmatprep.mubr.f32.mxu0 %v396
    %505 = vmatmul.mubr.f32.gmra.mrb[0].mxu0 %v395
    %v506 = vpop.f32.mrb[0].mxu0
    %v507 = vadd.f32 %v438, %v506
    %v508 = vpop.f32.mrb[0].mxu0
    %509 = vmatprep.mubr.f32.mxu0 %v398
    %510 = vmatmul.mubr.f32.gmra.mrb[0].mxu0 %v397
    %v511 = vpop.f32.mrb[0].mxu0
    %v512 = vadd.f32 %v438, %v511
    %v513 = vpop.f32.mrb[0].mxu0
    %514 = vmatprep.mubr.f32.mxu0 %v400
    %515 = vmatmul.mubr.f32.gmra.mrb[0].mxu0 %v399
    %v516 = vpop.f32.mrb[0].mxu0
    %v517 = vadd.f32 %v438, %v516
    %v518 = vpop.f32.mrb[0].mxu0
    %519 = vdwg.mxu0
    %520 = vst [vmem:[#allocation8] sm:$0xff] %v507
    %521 = vst [vmem:[#allocation8 + $0x8] sm:$0xff] %v512
    %522 = vst [vmem:[#allocation8 + $0x10] sm:$0xff] %v517
    // Predicated region
    $region30: #{tpu_custom_call.1} parent=1 // pred_check
      _
    $region31: #{tpu_custom_call.1} parent=1 // pred_check_branch
      %524 = sbr.rel (0) target = $region33
    $region32: #{tpu_custom_call.1} parent=1 // pred_region
      %s526 = ssub.s32 384, 384
      %527 = vsyncadd [#allocation4], %s526
      %s528 = sshll.u32 [#allocation8], 4
      %s529 = int_to_ptr.vmem [resolvable:$true] %s528
      %534 = dma.vmem_to_hbm [thread:$0]  %s529, 384, %s4, [#allocation4], 128, 128, 8
    $region33: #{tpu_custom_call.1} parent=1 // pred_fallthru
      _
    // Predicated region
    $region34: #{tpu_custom_call.1} parent=1 // pred_check
      _
    $region35: #{tpu_custom_call.1} parent=1 // pred_check_branch
      %536 = sbr.rel (0) target = $region37
    $region36: #{tpu_custom_call.1} parent=1 // pred_region
      %537 = dma.done [#allocation4], 384
    $region37: #{tpu_custom_call.1} parent=1 // pred_fallthru
      _
    %538 = vsyncpa [#allocation3], 1
    %539 = vsyncpa [#allocation6], 1
    %540 = vsyncpa [#allocation4], 1

</llo_original>
